<compile_context>
chip_gen: v6e
topology: v6e:2x2x1
jax: 0.10.0
libtpu: 0.0.40
codegen_flags: <defaults>
</compile_context>

<pallas_src>
import jax
import jax.numpy as jnp
from jax.experimental import pallas as pl
from jax.experimental.pallas import tpu as pltpu


def attention_layer_kernel(qln_ref, k_ref, w_inv_ref, w_kl_ref, bvec_ref, out_ref):
    qln = qln_ref[...]                  # (TB, 5E)  = [queries | last_node]
    k = k_ref[...]                      # (TB, L, E)
    TB, L, E = k.shape
    H = w_inv_ref.shape[1]

    bvec = bvec_ref[...]                # (3, H): [b1 ; 0.5*w2 ; 0.5*b2 (broadcast)]
    b1 = bvec[0:1, :]                   # (1, H)
    w2h = bvec[1:2, :]                  # (1, H)
    b2h = bvec[2:3, 0:1]                # (1, 1)

    # ---- first Linear(8E -> H), concat-free & merged -------------------------------
    # L-invariant per-batch-row term (one MXU dot, b1 folded in once per row):
    #   [q | ln] @ [W1_q + W1_c ; W1_ln] + b1
    hq = jnp.dot(qln, w_inv_ref[...], preferred_element_type=jnp.float32) + b1   # (TB, H)

    # Per-(b, l) term (one MXU dot):  [k | q*k] @ [W1_k - W1_c ; W1_m]
    # (TB, L) merges into the sublane axis for free because L == 8, so these reshapes
    # are layout-preserving; q broadcast is a sublane-stride-0 read.
    q = qln[:, :E]                                      # (TB, E) static lane slice
    k2 = k.reshape(TB * L, E)
    qk2 = (q[:, None, :] * k).reshape(TB * L, E)
    x2 = jnp.concatenate([k2, qk2], axis=-1)            # (TB*L, 2E) single lane concat
    hk = jnp.dot(x2, w_kl_ref[...], preferred_element_type=jnp.float32)          # (TB*L, H)

    # TODO(synk): Dropout(p=0.1) before this Linear is identity at inference; training-mode
    # dropout (pltpu.prng_seed / prng_random_bits) is not modeled.
    h = hk.reshape(TB, L, H) + hq[:, None, :]           # (TB, L, H)
    h = jnp.maximum(h, 0.01 * h)                        # LeakyReLU(0.01)

    # ---- second Linear(H -> 1): VPU multiply + lane reduce, keepdims so L stays on the
    # sublane axis (same layout as keys -> no relayout before the weighted sum).
    # w2/b2 were pre-scaled by 0.5 host-side: s_half = 0.5 * (h @ w2 + b2).
    s_half = jnp.sum(h * w2h, axis=-1, keepdims=True) + b2h            # (TB, L, 1)

    # sigmoid(s)/sqrt(E) == (0.5/sqrt(E)) * (tanh(s/2) + 1): EUP tanh, scale folded in.
    att = (0.5 * E ** -0.5) * (jnp.tanh(s_half) + 1.0)                 # (TB, L, 1)

    # (B,1,L) @ (B,L,E) as a weighted sum over L: att lane-broadcasts over E, then one
    # cross-sublane reduce (L == 8).
    out = jnp.sum(att * k, axis=1)                                     # (TB, E)
    out_ref[...] = out.astype(out_ref.dtype)


def prepare_attention_params(w1, b1, w2, b2, emb_size):
    """Load-time weight folding/packing (hoisted out of the per-call path).

    x @ W1 = q@(W1_q+W1_c) + k@(W1_k-W1_c) + (q*k)@W1_m + ln@W1_ln, so the kernel never
    materializes cat([q, k, q-k, q*k, ln]).  Returns:
      w_inv: (5E, H) = [W1_q + W1_c ; W1_ln]   (multiplies [q | ln])
      w_kl:  (2E, H) = [W1_k - W1_c ; W1_m]    (multiplies [k | q*k])
      bvec:  (3, H)  = [b1 ; 0.5*w2 ; 0.5*b2]  (0.5 pre-folds the tanh-sigmoid halving)
    """
    E = emb_size
    H = w1.shape[1]
    assert w1.shape[0] == 8 * E, "first Linear expects concat width 8*E"
    w1_q = w1[0 * E:1 * E]
    w1_k = w1[1 * E:2 * E]
    w1_c = w1[2 * E:3 * E]     # rows for (q - k)
    w1_m = w1[3 * E:4 * E]     # rows for (q * k)
    w1_ln = w1[4 * E:8 * E]

    w_inv = jnp.concatenate([w1_q + w1_c, w1_ln], axis=0)     # (5E, H)
    w_kl = jnp.concatenate([w1_k - w1_c, w1_m], axis=0)       # (2E, H)
    b2_scalar = 0.5 * jnp.asarray(b2).reshape(())
    bvec = jnp.stack([b1.reshape(H),
                      0.5 * w2.reshape(H),
                      jnp.full((H,), b2_scalar, dtype=b1.dtype)], axis=0)  # (3, H)
    return w_inv, w_kl, bvec


def attention_layer_forward(queries, keys, last_node, w_inv, w_kl, bvec, *, block_b=None):
    B, L, E = keys.shape
    H = w_inv.shape[1]

    # One host-side concat removes a separate operand DMA; the kernel slices q back out
    # with a free static lane slice.
    qln = jnp.concatenate([queries, last_node], axis=-1)       # (B, 5E)

    # Single grid step by default: at small B the per-step overhead dominates everything.
    # block_b stays available for large B (2 TCs on v7x via dimension_semantics).
    if block_b is None:
        block_b = B

    Bp = pl.cdiv(B, block_b) * block_b
    if Bp != B:
        pad = Bp - B
        qln = jnp.pad(qln, ((0, pad), (0, 0)))
        keys = jnp.pad(keys, ((0, pad), (0, 0), (0, 0)))

    out = pl.pallas_call(
        attention_layer_kernel,
        out_shape=jax.ShapeDtypeStruct((Bp, E), queries.dtype),
        grid=(Bp // block_b,),
        in_specs=[
            pl.BlockSpec((block_b, 5 * E), lambda i: (i, 0)),          # [q | last_node]
            pl.BlockSpec((block_b, L, E), lambda i: (i, 0, 0)),        # keys
            pl.BlockSpec(w_inv.shape, lambda i: (0, 0)),               # (5E, H) weights
            pl.BlockSpec(w_kl.shape, lambda i: (0, 0)),                # (2E, H) weights
            pl.BlockSpec(bvec.shape, lambda i: (0, 0)),                # (3, H) biases/w2
        ],
        out_specs=pl.BlockSpec((block_b, E), lambda i: (i, 0)),
        compiler_params=pltpu.CompilerParams(
            dimension_semantics=("parallel",)),  # batch tiles independent (2 TCs on v7x)
    )(qln, keys, w_inv, w_kl, bvec)
    return out[:B]


def reference_forward(queries, keys, last_node, w1, b1, w2, b2):
    # Straightforward (un-folded) transcription of the PyTorch forward, for checking.
    B, L, E = keys.shape
    qb = jnp.broadcast_to(queries[:, None, :], (B, L, E))
    lnb = jnp.broadcast_to(last_node[:, None, :], (B, L, 4 * E))
    x = jnp.concatenate([qb, keys, qb - keys, qb * keys, lnb], axis=-1)
    h = x @ w1 + b1
    h = jnp.where(h > 0, h, 0.01 * h)
    att = jax.nn.sigmoid(h @ w2 + b2)               # (B, L, 1)
    att = jnp.swapaxes(att, -1, -2) / (E ** 0.5)    # (B, 1, L)
    return jnp.squeeze(att @ keys, axis=1)          # (B, E)


if __name__ == "__main__":
    # Sizes implied by att_hidden_size=[80, 40]: concat feature dim 8E = 80 -> E = 10.
    B, L, E = 16, 8, 10
    H_IN, H_HID = 8 * E, 40

    key = jax.random.PRNGKey(0)
    kq, kk, kl, kw1, kb1, kw2, kb2 = jax.random.split(key, 7)

    queries = jax.random.normal(kq, (B, E), dtype=jnp.float32)
    keys = jax.random.normal(kk, (B, L, E), dtype=jnp.float32)
    last_node = jax.random.normal(kl, (B, 4 * E), dtype=jnp.float32)

    # "Linear" parameters stored as (in, out) so forward is x @ W + b.
    w1 = jax.random.normal(kw1, (H_IN, H_HID), dtype=jnp.float32) * 0.1
    b1 = jax.random.normal(kb1, (H_HID,), dtype=jnp.float32) * 0.1
    w2 = jax.random.normal(kw2, (H_HID, 1), dtype=jnp.float32) * 0.1
    b2 = jax.random.normal(kb2, (1,), dtype=jnp.float32) * 0.1

    # Weight folding happens once at load time; the per-call path is jitted.
    w_inv, w_kl, bvec = prepare_attention_params(w1, b1, w2, b2, E)
    fwd = jax.jit(attention_layer_forward)   # block_b default -> single grid step

    out = jax.block_until_ready(fwd(queries, keys, last_node, w_inv, w_kl, bvec))

    ref = reference_forward(queries, keys, last_node, w1, b1, w2, b2)
    assert out.shape == (B, E)
    assert jnp.allclose(out, ref, atol=2e-5, rtol=1e-4), (out, ref)

    print("KERNEL_OK")
</pallas_src>

<mosaic_0001>
module attributes {stable_mosaic.version = 11 : i64} {
  func.func @attention_layer_kernel(%arg0: i32, %arg1: memref<16x50xf32, #tpu.memory_space<vmem>>, %arg2: memref<16x8x10xf32, #tpu.memory_space<vmem>>, %arg3: memref<50x40xf32, #tpu.memory_space<vmem>>, %arg4: memref<20x40xf32, #tpu.memory_space<vmem>>, %arg5: memref<3x40xf32, #tpu.memory_space<vmem>>, %arg6: memref<16x10xf32, #tpu.memory_space<vmem>>) attributes {dimension_semantics = [#tpu.dimension_semantics<parallel>], iteration_bounds = array<i64: 1>, scalar_prefetch = 0 : i64, scratch_operands = 0 : i64, tpu.core_type = #tpu.core_type<tc>, window_params = [{transform_indices = @transform_0, window_bounds = array<i64: 16, 50>}, {transform_indices = @transform_1, window_bounds = array<i64: 16, 8, 10>}, {pipeline_mode = #tpu.pipeline_mode<synchronous>, transform_indices = @transform_2, window_bounds = array<i64: 50, 40>}, {pipeline_mode = #tpu.pipeline_mode<synchronous>, transform_indices = @transform_3, window_bounds = array<i64: 20, 40>}, {pipeline_mode = #tpu.pipeline_mode<synchronous>, transform_indices = @transform_4, window_bounds = array<i64: 3, 40>}, {transform_indices = @transform_5, window_bounds = array<i64: 16, 10>}]} {
    %c0 = arith.constant 0 : index
    %c0_0 = arith.constant 0 : index
    %0 = vector.load %arg1[%c0, %c0_0] : memref<16x50xf32, #tpu.memory_space<vmem>>, vector<16x50xf32>
    %c0_1 = arith.constant 0 : index
    %c0_2 = arith.constant 0 : index
    %c0_3 = arith.constant 0 : index
    %1 = vector.load %arg2[%c0_1, %c0_2, %c0_3] : memref<16x8x10xf32, #tpu.memory_space<vmem>>, vector<16x8x10xf32>
    %c0_4 = arith.constant 0 : index
    %c0_5 = arith.constant 0 : index
    %2 = vector.load %arg5[%c0_4, %c0_5] : memref<3x40xf32, #tpu.memory_space<vmem>>, vector<3x40xf32>
    %3 = vector.extract_strided_slice %2 {offsets = [0, 0], sizes = [1, 40], strides = [1, 1]} : vector<3x40xf32> to vector<1x40xf32>
    %4 = vector.extract_strided_slice %2 {offsets = [1, 0], sizes = [1, 40], strides = [1, 1]} : vector<3x40xf32> to vector<1x40xf32>
    %5 = vector.extract_strided_slice %2 {offsets = [2, 0], sizes = [1, 1], strides = [1, 1]} : vector<3x40xf32> to vector<1x1xf32>
    %c0_6 = arith.constant 0 : index
    %c0_7 = arith.constant 0 : index
    %6 = vector.load %arg3[%c0_6, %c0_7] : memref<50x40xf32, #tpu.memory_space<vmem>>, vector<50x40xf32>
    %cst = arith.constant dense<0.000000e+00> : vector<16x40xf32>
    %7 = tpu.matmul %0, %6, %cst {dimension_numbers = #tpu.dot_dimension_numbers<[1], [0], [0], [1], [0, 0, 1, 1], [], []>} : vector<16x50xf32>, vector<50x40xf32>, vector<16x40xf32> -> vector<16x40xf32>
    %8 = vector.broadcast %3 : vector<1x40xf32> to vector<16x40xf32>
    %9 = arith.addf %7, %8 : vector<16x40xf32>
    %10 = vector.extract_strided_slice %0 {offsets = [0, 0], sizes = [16, 10], strides = [1, 1]} : vector<16x50xf32> to vector<16x10xf32>
    %11 = vector.shape_cast %1 : vector<16x8x10xf32> to vector<128x10xf32>
    %12 = vector.shape_cast %10 : vector<16x10xf32> to vector<16x1x10xf32>
    %13 = vector.broadcast %12 : vector<16x1x10xf32> to vector<16x8x10xf32>
    %14 = arith.mulf %13, %1 : vector<16x8x10xf32>
    %15 = vector.shape_cast %14 : vector<16x8x10xf32> to vector<128x10xf32>
    %16 = tpu.concatenate %11, %15 in 1 : vector<128x10xf32>, vector<128x10xf32> -> vector<128x20xf32>
    %c0_8 = arith.constant 0 : index
    %c0_9 = arith.constant 0 : index
    %17 = vector.load %arg4[%c0_8, %c0_9] : memref<20x40xf32, #tpu.memory_space<vmem>>, vector<20x40xf32>
    %cst_10 = arith.constant dense<0.000000e+00> : vector<128x40xf32>
    %18 = tpu.matmul %16, %17, %cst_10 {dimension_numbers = #tpu.dot_dimension_numbers<[1], [0], [0], [1], [0, 0, 1, 1], [], []>} : vector<128x20xf32>, vector<20x40xf32>, vector<128x40xf32> -> vector<128x40xf32>
    %19 = vector.shape_cast %18 : vector<128x40xf32> to vector<16x8x40xf32>
    %20 = vector.shape_cast %9 : vector<16x40xf32> to vector<16x1x40xf32>
    %21 = vector.broadcast %20 : vector<16x1x40xf32> to vector<16x8x40xf32>
    %22 = arith.addf %19, %21 : vector<16x8x40xf32>
    %cst_11 = arith.constant 0.00999999977 : f32
    %23 = vector.broadcast %cst_11 : f32 to vector<16x8x40xf32>
    %24 = arith.mulf %23, %22 : vector<16x8x40xf32>
    %25 = arith.maximumf %22, %24 : vector<16x8x40xf32>
    %26 = vector.shape_cast %4 : vector<1x40xf32> to vector<1x1x40xf32>
    %27 = vector.broadcast %26 : vector<1x1x40xf32> to vector<16x8x40xf32>
    %28 = arith.mulf %25, %27 : vector<16x8x40xf32>
    %cst_12 = arith.constant dense<0.000000e+00> : vector<16x8xf32>
    %29 = vector.multi_reduction <add>, %28, %cst_12 [2] : vector<16x8x40xf32> to vector<16x8xf32>
    %30 = vector.shape_cast %29 : vector<16x8xf32> to vector<16x8x1xf32>
    %31 = vector.shape_cast %5 : vector<1x1xf32> to vector<1x1x1xf32>
    %32 = vector.broadcast %31 : vector<1x1x1xf32> to vector<16x8x1xf32>
    %33 = arith.addf %30, %32 : vector<16x8x1xf32>
    %34 = math.tanh %33 : vector<16x8x1xf32>
    %cst_13 = arith.constant 1.000000e+00 : f32
    %35 = vector.broadcast %cst_13 : f32 to vector<16x8x1xf32>
    %36 = arith.addf %34, %35 : vector<16x8x1xf32>
    %cst_14 = arith.constant 0.158113882 : f32
    %37 = vector.broadcast %cst_14 : f32 to vector<16x8x1xf32>
    %38 = arith.mulf %37, %36 : vector<16x8x1xf32>
    %39 = vector.broadcast %38 : vector<16x8x1xf32> to vector<16x8x10xf32>
    %40 = arith.mulf %39, %1 : vector<16x8x10xf32>
    %cst_15 = arith.constant dense<0.000000e+00> : vector<16x10xf32>
    %41 = vector.multi_reduction <add>, %40, %cst_15 [1] : vector<16x8x10xf32> to vector<16x10xf32>
    %c0_16 = arith.constant 0 : index
    %c0_17 = arith.constant 0 : index
    %42 = vector.load %arg6[%c0_16, %c0_17] : memref<16x10xf32, #tpu.memory_space<vmem>>, vector<16x10xf32>
    tpu.vector_store %arg6[%c0_16, %c0_17], %41 {strides = array<i32>} : memref<16x10xf32, #tpu.memory_space<vmem>>, vector<16x10xf32>,
    return
  }
  func.func @transform_0(%arg0: i32) -> (i32, i32) {
    %c0_i32 = arith.constant 0 : i32
    %c0_i32_0 = arith.constant 0 : i32
    return %arg0, %c0_i32 : i32, i32
  }
  func.func @transform_1(%arg0: i32) -> (i32, i32, i32) {
    %c0_i32 = arith.constant 0 : i32
    %c0_i32_0 = arith.constant 0 : i32
    %c0_i32_1 = arith.constant 0 : i32
    return %arg0, %c0_i32, %c0_i32_0 : i32, i32, i32
  }
  func.func @transform_2(%arg0: i32) -> (i32, i32) {
    %c0_i32 = arith.constant 0 : i32
    %c0_i32_0 = arith.constant 0 : i32
    %c0_i32_1 = arith.constant 0 : i32
    return %c0_i32, %c0_i32_0 : i32, i32
  }
  func.func @transform_3(%arg0: i32) -> (i32, i32) {
    %c0_i32 = arith.constant 0 : i32
    %c0_i32_0 = arith.constant 0 : i32
    %c0_i32_1 = arith.constant 0 : i32
    return %c0_i32, %c0_i32_0 : i32, i32
  }
  func.func @transform_4(%arg0: i32) -> (i32, i32) {
    %c0_i32 = arith.constant 0 : i32
    %c0_i32_0 = arith.constant 0 : i32
    %c0_i32_1 = arith.constant 0 : i32
    return %c0_i32, %c0_i32_0 : i32, i32
  }
  func.func @transform_5(%arg0: i32) -> (i32, i32) {
    %c0_i32 = arith.constant 0 : i32
    %c0_i32_0 = arith.constant 0 : i32
    return %arg0, %c0_i32 : i32, i32
  }
}

</mosaic_0001>

<llo_original>
// kernel: attention_layer_forward.1
$region0: #{attention_layer_forward.1}
  #allocation0 [shape = 'u32[]', space=smem, size = 0x4, offset = 0x4, fixed_abs, tag = 'smem constant byte address 0x4 - core index']
  #allocation1 [shape = 'u32[144,128]{1,0:T(1,128)}', space=vmem, size = 0x12000, scoped, tag = 'internal scratch']
  %s0 = inlined_call_operand.vmem [shape: f32[16,50], index: 0, kind: input, shape index: {}]
  %s1 = inlined_call_operand.vmem [shape: f32[16,8,10], index: 1, kind: input, shape index: {}]
  %s2 = inlined_call_operand.vmem [shape: f32[50,40], index: 2, kind: input, shape index: {}]
  %s3 = inlined_call_operand.vmem [shape: f32[20,40], index: 3, kind: input, shape index: {}]
  %s4 = inlined_call_operand.vmem [shape: f32[3,40], index: 4, kind: input, shape index: {}]
  %s5 = inlined_call_operand.hbm [shape: f32[16,10], index: 5, kind: output, shape index: {}]
  %s6 = sld [smem:[#allocation0]]
  $region30: #{attention_layer_forward.1} parent=0
    _
  %s8 = ssub.s32 1, %s6
  %s9 = scalar_select 0, %s8, %s6
  $region1: #{attention_layer_forward.1} parent=0
    #allocation2 [shape = 'u8[8192]{0}', space=vmem, size = 0x2000, scoped, tag = 'output window, operand 0, single buffered']
    #allocation3 [shape = 's32[1]{0}', space=sflag, size = 0x4, scoped, tag = 'scoped memory for attention_layer_forward.1']
    %10 = vsyncpa [#allocation3], 0
    // Predicated region
    $region2: #{attention_layer_forward.1} parent=1 // pred_check
      _
    $region3: #{attention_layer_forward.1} parent=1 // pred_check_branch
      %12 = sbr.rel (0) target = $region5
    $region4: #{attention_layer_forward.1} parent=1 // pred_region
      _
    $region5: #{attention_layer_forward.1} parent=1 // pred_fallthru
      _
    // Predicated region
    $region6: #{attention_layer_forward.1} parent=1 // pred_check
      _
    $region7: #{attention_layer_forward.1} parent=1 // pred_check_branch
      %14 = sbr.rel (0) target = $region9
    $region8: #{attention_layer_forward.1} parent=1 // pred_region
      _
    $region9: #{attention_layer_forward.1} parent=1 // pred_fallthru
      _
    // Predicated region
    $region10: #{attention_layer_forward.1} parent=1 // pred_check
      _
    $region11: #{attention_layer_forward.1} parent=1 // pred_check_branch
      %16 = sbr.rel (0) target = $region13
    $region12: #{attention_layer_forward.1} parent=1 // pred_region
      _
    $region13: #{attention_layer_forward.1} parent=1 // pred_fallthru
      _
    // Predicated region
    $region14: #{attention_layer_forward.1} parent=1 // pred_check
      _
    $region15: #{attention_layer_forward.1} parent=1 // pred_check_branch
      %18 = sbr.rel (0) target = $region17
    $region16: #{attention_layer_forward.1} parent=1 // pred_region
      _
    $region17: #{attention_layer_forward.1} parent=1 // pred_fallthru
      _
    // Predicated region
    $region18: #{attention_layer_forward.1} parent=1 // pred_check
      _
    $region19: #{attention_layer_forward.1} parent=1 // pred_check_branch
      %20 = sbr.rel (0) target = $region21
    $region20: #{attention_layer_forward.1} parent=1 // pred_region
      _
    $region21: #{attention_layer_forward.1} parent=1 // pred_fallthru
      _
    %v21 = vld [vmem:[%s0] sm:$0xff]
    %v22 = vld [vmem:[%s0 + $0x8] sm:$0xff]
    %v23 = vld [vmem:[%s1] sm:$0xff]
    %v24 = vld [vmem:[%s1 + $0x8] sm:$0xff]
    %v25 = vld [vmem:[%s1 + $0x10] sm:$0xff]
    %v26 = vld [vmem:[%s1 + $0x18] sm:$0xff]
    %v27 = vld [vmem:[%s1 + $0x20] sm:$0xff]
    %v28 = vld [vmem:[%s1 + $0x28] sm:$0xff]
    %v29 = vld [vmem:[%s1 + $0x30] sm:$0xff]
    %v30 = vld [vmem:[%s1 + $0x38] sm:$0xff]
    %v31 = vld [vmem:[%s1 + $0x40] sm:$0xff]
    %v32 = vld [vmem:[%s1 + $0x48] sm:$0xff]
    %v33 = vld [vmem:[%s1 + $0x50] sm:$0xff]
    %v34 = vld [vmem:[%s1 + $0x58] sm:$0xff]
    %v35 = vld [vmem:[%s1 + $0x60] sm:$0xff]
    %v36 = vld [vmem:[%s1 + $0x68] sm:$0xff]
    %v37 = vld [vmem:[%s1 + $0x70] sm:$0xff]
    %v38 = vld [vmem:[%s1 + $0x78] sm:$0xff]
    %v39 = vld [vmem:[%s4] sm:$0x7]
    %v40 = vld [vmem:[%s2] sm:$0xff]
    %v41 = vld [vmem:[%s2 + $0x8] sm:$0xff]
    %v42 = vld [vmem:[%s2 + $0x10] sm:$0xff]
    %v43 = vld [vmem:[%s2 + $0x18] sm:$0xff]
    %v44 = vld [vmem:[%s2 + $0x20] sm:$0xff]
    %v45 = vld [vmem:[%s2 + $0x28] sm:$0xff]
    %v46 = vld [vmem:[%s2 + $0x30] sm:$0x3]
    %v47 = vlaneseq
    %v48 = vshrl.u32 %v47, 7
    %v49 = vsub.s32 0, %v48
    %v50 = vrot.slane %v39, %v49
    %vm51 = vcmask 408576
    %v53 = vsel %vm51, %v21, 0
    %v56 = vsel %vm51, %v22, 0
    %vm58 = vcmask 1041408
    %v60 = vsel %vm58, %v46, 0
    %62 = vmatprep.subr.mxu0 0.0
    %63 = vmatpush1.msra.mxu0 0.0
    %64 = vmatprep.subr.mxu0 0.0
    %65 = vmatpush1.msra.mxu0 0.0
    %66 = vmatprep.subr.mxu0 0.0
    %67 = vmatpush1.msra.mxu0 0.0
    %68 = vmatprep.subr.mxu0 0.0
    %69 = vmatpush1.msra.mxu0 0.0
    %70 = vmatprep.subr.mxu0 0.0
    %71 = vmatpush1.msra.mxu0 0.0
    %72 = vmatprep.subr.mxu0 0.0
    %73 = vmatpush1.msra.mxu0 0.0
    %74 = vmatprep.subr.mxu0 0.0
    %75 = vmatpush1.msra.mxu0 0.0
    %76 = vmatprep.subr.mxu0 0.0
    %77 = vmatpush1.msra.mxu0 0.0
    %78 = vmatprep.subr.mxu0 0.0
    %79 = vmatpush1.msra.mxu0 0.0
    %80 = vmatprep.subr.mxu0 0.0
    %81 = vmatpush1.msra.mxu0 %v60
    %82 = vmatprep.subr.mxu0 0.0
    %83 = vmatpush1.msra.mxu0 %v45
    %84 = vmatprep.subr.mxu0 0.0
    %85 = vmatpush1.msra.mxu0 %v44
    %86 = vmatprep.subr.mxu0 0.0
    %87 = vmatpush1.msra.mxu0 %v43
    %88 = vmatprep.subr.mxu0 0.0
    %89 = vmatpush1.msra.mxu0 %v42
    %90 = vmatprep.subr.mxu0 0.0
    %91 = vmatpush1.msra.mxu0 %v41
    %92 = vmatprep.subr.mxu0 0.0
    %93 = vmatpush1.msra.mxu0 %v40
    %94 = vmatprep.subr.mxu0 0.0
    %95 = vmatpush2.msra.mxu0 0.0
    %96 = vmatprep.subr.mxu0 0.0
    %97 = vmatpush2.msra.mxu0 0.0
    %98 = vmatprep.subr.mxu0 0.0
    %99 = vmatpush2.msra.mxu0 0.0
    %100 = vmatprep.subr.mxu0 0.0
    %101 = vmatpush2.msra.mxu0 0.0
    %102 = vmatprep.subr.mxu0 0.0
    %103 = vmatpush2.msra.mxu0 0.0
    %104 = vmatprep.subr.mxu0 0.0
    %105 = vmatpush2.msra.mxu0 0.0
    %106 = vmatprep.subr.mxu0 0.0
    %107 = vmatpush2.msra.mxu0 0.0
    %108 = vmatprep.subr.mxu0 0.0
    %109 = vmatpush2.msra.mxu0 0.0
    %110 = vmatprep.subr.mxu0 0.0
    %111 = vmatpush2.msra.mxu0 0.0
    %112 = vmatprep.subr.mxu0 0.0
    %113 = vmatpush2.msra.mxu0 0.0
    %114 = vmatprep.subr.mxu0 0.0
    %115 = vmatpush2.msra.mxu0 0.0
    %116 = vmatprep.subr.mxu0 0.0
    %117 = vmatpush2.msra.mxu0 0.0
    %118 = vmatprep.subr.mxu0 0.0
    %119 = vmatpush2.msra.mxu0 0.0
    %120 = vmatprep.subr.mxu0 0.0
    %121 = vmatpush2.msra.mxu0 0.0
    %122 = vmatprep.subr.mxu0 0.0
    %123 = vmatpush2.msra.mxu0 0.0
    %124 = vmatprep.subr.mxu0 0.0
    %125 = vmatpush2.msra.mxu0 0.0
    %126 = vmatprep.mubr.f32.mxu0 0.0
    %127 = vmatmul.mubr.f32.gmra.mxu0 %v53
    %v128 = vpop.f32.mrf.mxu0
    %v129 = vadd.f32 %v50, %v128
    %v130 = vpop.f32.mrf.mxu0
    %131 = vmatprep.mubr.f32.mxu0 0.0
    %132 = vmatmul.mubr.f32.gmra.mxu0 %v56
    %v133 = vpop.f32.mrf.mxu0
    %v134 = vadd.f32 %v50, %v133
    %v135 = vpop.f32.mrf.mxu0
    %136 = vdwg.mxu0
    %v137 = vcombine.high %v21, %v21
    %v139 = vunpack.c.l.s4 1966171168
    %v140 = vunpack.c.0.s8 %v139
    %v141 = vlaneseq
    %v142 = vshrl.u32 %v141, 7
    %v143 = vsub.s32 %v140, %v142
    %v144 = vrot.slane %v21, %v143
    %v146 = vunpack.c.l.s4 1966171168
    %v147 = vunpack.c.0.s8 %v146
    %v148 = vlaneseq
    %v149 = vshrl.u32 %v148, 7
    %v150 = vsub.s32 %v147, %v149
    %v151 = vrot.slane %v137, %v150
    %v152 = vcombine.high %v144, %v144
    %v153 = vcombine.high %v151, %v151
    %v155 = vunpack.c.l.s4 1966171168
    %v156 = vunpack.c.0.s8 %v155
    %v157 = vlaneseq
    %v158 = vshrl.u32 %v157, 7
    %v159 = vsub.s32 %v156, %v158
    %v160 = vrot.slane %v144, %v159
    %v162 = vunpack.c.l.s4 1966171168
    %v163 = vunpack.c.0.s8 %v162
    %v164 = vlaneseq
    %v165 = vshrl.u32 %v164, 7
    %v166 = vsub.s32 %v163, %v165
    %v167 = vrot.slane %v151, %v166
    %v169 = vunpack.c.l.s4 1966171168
    %v170 = vunpack.c.0.s8 %v169
    %v171 = vlaneseq
    %v172 = vshrl.u32 %v171, 7
    %v173 = vsub.s32 %v170, %v172
    %v174 = vrot.slane %v152, %v173
    %v176 = vunpack.c.l.s4 1966171168
    %v177 = vunpack.c.0.s8 %v176
    %v178 = vlaneseq
    %v179 = vshrl.u32 %v178, 7
    %v180 = vsub.s32 %v177, %v179
    %v181 = vrot.slane %v153, %v180
    %v182 = vcombine.high %v160, %v160
    %v183 = vcombine.high %v167, %v167
    %v184 = vcombine.high %v174, %v174
    %v185 = vcombine.high %v181, %v181
    %v186 = vcombine.high %v22, %v22
    %v188 = vunpack.c.l.s4 1966171168
    %v189 = vunpack.c.0.s8 %v188
    %v190 = vlaneseq
    %v191 = vshrl.u32 %v190, 7
    %v192 = vsub.s32 %v189, %v191
    %v193 = vrot.slane %v22, %v192
    %v195 = vunpack.c.l.s4 1966171168
    %v196 = vunpack.c.0.s8 %v195
    %v197 = vlaneseq
    %v198 = vshrl.u32 %v197, 7
    %v199 = vsub.s32 %v196, %v198
    %v200 = vrot.slane %v186, %v199
    %v201 = vcombine.high %v193, %v193
    %v202 = vcombine.high %v200, %v200
    %v204 = vunpack.c.l.s4 1966171168
    %v205 = vunpack.c.0.s8 %v204
    %v206 = vlaneseq
    %v207 = vshrl.u32 %v206, 7
    %v208 = vsub.s32 %v205, %v207
    %v209 = vrot.slane %v193, %v208
    %v211 = vunpack.c.l.s4 1966171168
    %v212 = vunpack.c.0.s8 %v211
    %v213 = vlaneseq
    %v214 = vshrl.u32 %v213, 7
    %v215 = vsub.s32 %v212, %v214
    %v216 = vrot.slane %v200, %v215
    %v218 = vunpack.c.l.s4 1966171168
    %v219 = vunpack.c.0.s8 %v218
    %v220 = vlaneseq
    %v221 = vshrl.u32 %v220, 7
    %v222 = vsub.s32 %v219, %v221
    %v223 = vrot.slane %v201, %v222
    %v225 = vunpack.c.l.s4 1966171168
    %v226 = vunpack.c.0.s8 %v225
    %v227 = vlaneseq
    %v228 = vshrl.u32 %v227, 7
    %v229 = vsub.s32 %v226, %v228
    %v230 = vrot.slane %v202, %v229
    %v231 = vcombine.high %v209, %v209
    %v232 = vcombine.high %v216, %v216
    %v233 = vcombine.high %v223, %v223
    %v234 = vcombine.high %v230, %v230
    %v235 = vlaneseq
    %v236 = vshrl.u32 %v235, 7
    %v237 = vsub.s32 0, %v236
    %v238 = vrot.slane %v160, %v237
    %v239 = vlaneseq
    %v240 = vshrl.u32 %v239, 7
    %v241 = vsub.s32 0, %v240
    %v242 = vrot.slane %v174, %v241
    %v243 = vlaneseq
    %v244 = vshrl.u32 %v243, 7
    %v245 = vsub.s32 0, %v244
    %v246 = vrot.slane %v182, %v245
    %v247 = vlaneseq
    %v248 = vshrl.u32 %v247, 7
    %v249 = vsub.s32 0, %v248
    %v250 = vrot.slane %v184, %v249
    %v251 = vlaneseq
    %v252 = vshrl.u32 %v251, 7
    %v253 = vsub.s32 0, %v252
    %v254 = vrot.slane %v167, %v253
    %v255 = vlaneseq
    %v256 = vshrl.u32 %v255, 7
    %v257 = vsub.s32 0, %v256
    %v258 = vrot.slane %v181, %v257
    %v259 = vlaneseq
    %v260 = vshrl.u32 %v259, 7
    %v261 = vsub.s32 0, %v260
    %v262 = vrot.slane %v183, %v261
    %v263 = vlaneseq
    %v264 = vshrl.u32 %v263, 7
    %v265 = vsub.s32 0, %v264
    %v266 = vrot.slane %v185, %v265
    %v267 = vlaneseq
    %v268 = vshrl.u32 %v267, 7
    %v269 = vsub.s32 0, %v268
    %v270 = vrot.slane %v209, %v269
    %v271 = vlaneseq
    %v272 = vshrl.u32 %v271, 7
    %v273 = vsub.s32 0, %v272
    %v274 = vrot.slane %v223, %v273
    %v275 = vlaneseq
    %v276 = vshrl.u32 %v275, 7
    %v277 = vsub.s32 0, %v276
    %v278 = vrot.slane %v231, %v277
    %v279 = vlaneseq
    %v280 = vshrl.u32 %v279, 7
    %v281 = vsub.s32 0, %v280
    %v282 = vrot.slane %v233, %v281
    %v283 = vlaneseq
    %v284 = vshrl.u32 %v283, 7
    %v285 = vsub.s32 0, %v284
    %v286 = vrot.slane %v216, %v285
    %v287 = vlaneseq
    %v288 = vshrl.u32 %v287, 7
    %v289 = vsub.s32 0, %v288
    %v290 = vrot.slane %v230, %v289
    %v291 = vlaneseq
    %v292 = vshrl.u32 %v291, 7
    %v293 = vsub.s32 0, %v292
    %v294 = vrot.slane %v232, %v293
    %v295 = vlaneseq
    %v296 = vshrl.u32 %v295, 7
    %v297 = vsub.s32 0, %v296
    %v298 = vrot.slane %v234, %v297
    %v315 = vmul.f32 %v238, %v23
    %v316 = vmul.f32 %v242, %v24
    %v317 = vmul.f32 %v246, %v25
    %v318 = vmul.f32 %v250, %v26
    %v319 = vmul.f32 %v254, %v27
    %v320 = vmul.f32 %v258, %v28
    %v321 = vmul.f32 %v262, %v29
    %v322 = vmul.f32 %v266, %v30
    %v323 = vmul.f32 %v270, %v31
    %v324 = vmul.f32 %v274, %v32
    %v325 = vmul.f32 %v278, %v33
    %v326 = vmul.f32 %v282, %v34
    %v327 = vmul.f32 %v286, %v35
    %v328 = vmul.f32 %v290, %v36
    %v329 = vmul.f32 %v294, %v37
    %v330 = vmul.f32 %v298, %v38
    %347 = vrot.lane.b32.xlu0 %v315, 10
    %v348 = vpop.permute.xlu0 %347
    %349 = vrot.lane.b32.xlu0 %v316, 10
    %v350 = vpop.permute.xlu0 %349
    %351 = vrot.lane.b32.xlu0 %v317, 10
    %v352 = vpop.permute.xlu0 %351
    %353 = vrot.lane.b32.xlu0 %v318, 10
    %v354 = vpop.permute.xlu0 %353
    %355 = vrot.lane.b32.xlu0 %v319, 10
    %v356 = vpop.permute.xlu0 %355
    %357 = vrot.lane.b32.xlu0 %v320, 10
    %v358 = vpop.permute.xlu0 %357
    %359 = vrot.lane.b32.xlu0 %v321, 10
    %v360 = vpop.permute.xlu0 %359
    %361 = vrot.lane.b32.xlu0 %v322, 10
    %v362 = vpop.permute.xlu0 %361
    %363 = vrot.lane.b32.xlu0 %v323, 10
    %v364 = vpop.permute.xlu0 %363
    %365 = vrot.lane.b32.xlu0 %v324, 10
    %v366 = vpop.permute.xlu0 %365
    %367 = vrot.lane.b32.xlu0 %v325, 10
    %v368 = vpop.permute.xlu0 %367
    %369 = vrot.lane.b32.xlu0 %v326, 10
    %v370 = vpop.permute.xlu0 %369
    %371 = vrot.lane.b32.xlu0 %v327, 10
    %v372 = vpop.permute.xlu0 %371
    %373 = vrot.lane.b32.xlu0 %v328, 10
    %v374 = vpop.permute.xlu0 %373
    %375 = vrot.lane.b32.xlu0 %v329, 10
    %v376 = vpop.permute.xlu0 %375
    %377 = vrot.lane.b32.xlu0 %v330, 10
    %v378 = vpop.permute.xlu0 %377
    %vm395 = vcmask 80896
    %v396 = vsel %vm395, %v23, %v348
    %v397 = vsel %vm395, %v24, %v350
    %v398 = vsel %vm395, %v25, %v352
    %v399 = vsel %vm395, %v26, %v354
    %v400 = vsel %vm395, %v27, %v356
    %v401 = vsel %vm395, %v28, %v358
    %v402 = vsel %vm395, %v29, %v360
    %v403 = vsel %vm395, %v30, %v362
    %v404 = vsel %vm395, %v31, %v364
    %v405 = vsel %vm395, %v32, %v366
    %v406 = vsel %vm395, %v33, %v368
    %v407 = vsel %vm395, %v34, %v370
    %v408 = vsel %vm395, %v35, %v372
    %v409 = vsel %vm395, %v36, %v374
    %v410 = vsel %vm395, %v37, %v376
    %v411 = vsel %vm395, %v38, %v378
    %v412 = vld [vmem:[%s3] sm:$0xff]
    %v413 = vld [vmem:[%s3 + $0x8] sm:$0xff]
    %v414 = vld [vmem:[%s3 + $0x10] sm:$0xf]
    %vm415 = vcmask 162816
    %v417 = vsel %vm415, %v396, 0
    %v420 = vsel %vm415, %v397, 0
    %v423 = vsel %vm415, %v398, 0
    %v426 = vsel %vm415, %v399, 0
    %v429 = vsel %vm415, %v400, 0
    %v432 = vsel %vm415, %v401, 0
    %v435 = vsel %vm415, %v402, 0
    %v438 = vsel %vm415, %v403, 0
    %v441 = vsel %vm415, %v404, 0
    %v444 = vsel %vm415, %v405, 0
    %v447 = vsel %vm415, %v406, 0
    %v450 = vsel %vm415, %v407, 0
    %v453 = vsel %vm415, %v408, 0
    %v456 = vsel %vm415, %v409, 0
    %v459 = vsel %vm415, %v410, 0
    %v462 = vsel %vm415, %v411, 0
    %vm464 = vcmask 1043456
    %v466 = vsel %vm464, %v414, 0
    %468 = vmatprep.subr.mxu0 0.0
    %469 = vmatpush1.msra.mxu0 0.0
    %470 = vmatprep.subr.mxu0 0.0
    %471 = vmatpush1.msra.mxu0 0.0
    %472 = vmatprep.subr.mxu0 0.0
    %473 = vmatpush1.msra.mxu0 0.0
    %474 = vmatprep.subr.mxu0 0.0
    %475 = vmatpush1.msra.mxu0 0.0
    %476 = vmatprep.subr.mxu0 0.0
    %477 = vmatpush1.msra.mxu0 0.0
    %478 = vmatprep.subr.mxu0 0.0
    %479 = vmatpush1.msra.mxu0 0.0
    %480 = vmatprep.subr.mxu0 0.0
    %481 = vmatpush1.msra.mxu0 0.0
    %482 = vmatprep.subr.mxu0 0.0
    %483 = vmatpush1.msra.mxu0 0.0
    %484 = vmatprep.subr.mxu0 0.0
    %485 = vmatpush1.msra.mxu0 0.0
    %486 = vmatprep.subr.mxu0 0.0
    %487 = vmatpush1.msra.mxu0 0.0
    %488 = vmatprep.subr.mxu0 0.0
    %489 = vmatpush1.msra.mxu0 0.0
    %490 = vmatprep.subr.mxu0 0.0
    %491 = vmatpush1.msra.mxu0 0.0
    %492 = vmatprep.subr.mxu0 0.0
    %493 = vmatpush1.msra.mxu0 0.0
    %494 = vmatprep.subr.mxu0 0.0
    %495 = vmatpush1.msra.mxu0 %v466
    %496 = vmatprep.subr.mxu0 0.0
    %497 = vmatpush1.msra.mxu0 %v413
    %498 = vmatprep.subr.mxu0 0.0
    %499 = vmatpush1.msra.mxu0 %v412
    %500 = vmatprep.subr.mxu0 0.0
    %501 = vmatpush2.msra.mxu0 0.0
    %502 = vmatprep.subr.mxu0 0.0
    %503 = vmatpush2.msra.mxu0 0.0
    %504 = vmatprep.subr.mxu0 0.0
    %505 = vmatpush2.msra.mxu0 0.0
    %506 = vmatprep.subr.mxu0 0.0
    %507 = vmatpush2.msra.mxu0 0.0
    %508 = vmatprep.subr.mxu0 0.0
    %509 = vmatpush2.msra.mxu0 0.0
    %510 = vmatprep.subr.mxu0 0.0
    %511 = vmatpush2.msra.mxu0 0.0
    %512 = vmatprep.subr.mxu0 0.0
    %513 = vmatpush2.msra.mxu0 0.0
    %514 = vmatprep.subr.mxu0 0.0
    %515 = vmatpush2.msra.mxu0 0.0
    %516 = vmatprep.subr.mxu0 0.0
    %517 = vmatpush2.msra.mxu0 0.0
    %518 = vmatprep.subr.mxu0 0.0
    %519 = vmatpush2.msra.mxu0 0.0
    %520 = vmatprep.subr.mxu0 0.0
    %521 = vmatpush2.msra.mxu0 0.0
    %522 = vmatprep.subr.mxu0 0.0
    %523 = vmatpush2.msra.mxu0 0.0
    %524 = vmatprep.subr.mxu0 0.0
    %525 = vmatpush2.msra.mxu0 0.0
    %526 = vmatprep.subr.mxu0 0.0
    %527 = vmatpush2.msra.mxu0 0.0
    %528 = vmatprep.subr.mxu0 0.0
    %529 = vmatpush2.msra.mxu0 0.0
    %530 = vmatprep.subr.mxu0 0.0
    %531 = vmatpush2.msra.mxu0 0.0
    %532 = vmatprep.mubr.f32.mxu0 0.0
    %533 = vmatmul.mubr.f32.gmra.mxu0 %v417
    %v534 = vpop.f32.mrf.mxu0
    %v535 = vadd.f32 0.0, %v534
    %v536 = vpop.f32.mrf.mxu0
    %537 = vmatprep.mubr.f32.mxu0 0.0
    %538 = vmatmul.mubr.f32.gmra.mxu0 %v420
    %v539 = vpop.f32.mrf.mxu0
    %v540 = vadd.f32 0.0, %v539
    %v541 = vpop.f32.mrf.mxu0
    %542 = vmatprep.mubr.f32.mxu0 0.0
    %543 = vmatmul.mubr.f32.gmra.mxu0 %v423
    %v544 = vpop.f32.mrf.mxu0
    %v545 = vadd.f32 0.0, %v544
    %v546 = vpop.f32.mrf.mxu0
    %547 = vmatprep.mubr.f32.mxu0 0.0
    %548 = vmatmul.mubr.f32.gmra.mxu0 %v426
    %v549 = vpop.f32.mrf.mxu0
    %v550 = vadd.f32 0.0, %v549
    %v551 = vpop.f32.mrf.mxu0
    %552 = vmatprep.mubr.f32.mxu0 0.0
    %553 = vmatmul.mubr.f32.gmra.mxu0 %v429
    %v554 = vpop.f32.mrf.mxu0
    %v555 = vadd.f32 0.0, %v554
    %v556 = vpop.f32.mrf.mxu0
    %557 = vmatprep.mubr.f32.mxu0 0.0
    %558 = vmatmul.mubr.f32.gmra.mxu0 %v432
    %v559 = vpop.f32.mrf.mxu0
    %v560 = vadd.f32 0.0, %v559
    %v561 = vpop.f32.mrf.mxu0
    %562 = vmatprep.mubr.f32.mxu0 0.0
    %563 = vmatmul.mubr.f32.gmra.mxu0 %v435
    %v564 = vpop.f32.mrf.mxu0
    %v565 = vadd.f32 0.0, %v564
    %v566 = vpop.f32.mrf.mxu0
    %567 = vmatprep.mubr.f32.mxu0 0.0
    %568 = vmatmul.mubr.f32.gmra.mxu0 %v438
    %v569 = vpop.f32.mrf.mxu0
    %v570 = vadd.f32 0.0, %v569
    %v571 = vpop.f32.mrf.mxu0
    %572 = vmatprep.mubr.f32.mxu0 0.0
    %573 = vmatmul.mubr.f32.gmra.mxu0 %v441
    %v574 = vpop.f32.mrf.mxu0
    %v575 = vadd.f32 0.0, %v574
    %v576 = vpop.f32.mrf.mxu0
    %577 = vmatprep.mubr.f32.mxu0 0.0
    %578 = vmatmul.mubr.f32.gmra.mxu0 %v444
    %v579 = vpop.f32.mrf.mxu0
    %v580 = vadd.f32 0.0, %v579
    %v581 = vpop.f32.mrf.mxu0
    %582 = vmatprep.mubr.f32.mxu0 0.0
    %583 = vmatmul.mubr.f32.gmra.mxu0 %v447
    %v584 = vpop.f32.mrf.mxu0
    %v585 = vadd.f32 0.0, %v584
    %v586 = vpop.f32.mrf.mxu0
    %587 = vmatprep.mubr.f32.mxu0 0.0
    %588 = vmatmul.mubr.f32.gmra.mxu0 %v450
    %v589 = vpop.f32.mrf.mxu0
    %v590 = vadd.f32 0.0, %v589
    %v591 = vpop.f32.mrf.mxu0
    %592 = vmatprep.mubr.f32.mxu0 0.0
    %593 = vmatmul.mubr.f32.gmra.mxu0 %v453
    %v594 = vpop.f32.mrf.mxu0
    %v595 = vadd.f32 0.0, %v594
    %v596 = vpop.f32.mrf.mxu0
    %597 = vmatprep.mubr.f32.mxu0 0.0
    %598 = vmatmul.mubr.f32.gmra.mxu0 %v456
    %v599 = vpop.f32.mrf.mxu0
    %v600 = vadd.f32 0.0, %v599
    %v601 = vpop.f32.mrf.mxu0
    %602 = vmatprep.mubr.f32.mxu0 0.0
    %603 = vmatmul.mubr.f32.gmra.mxu0 %v459
    %v604 = vpop.f32.mrf.mxu0
    %v605 = vadd.f32 0.0, %v604
    %v606 = vpop.f32.mrf.mxu0
    %607 = vmatprep.mubr.f32.mxu0 0.0
    %608 = vmatmul.mubr.f32.gmra.mxu0 %v462
    %v609 = vpop.f32.mrf.mxu0
    %v610 = vadd.f32 0.0, %v609
    %v611 = vpop.f32.mrf.mxu0
    %612 = vdwg.mxu0
    %v615 = vcombine.high %v129, %v129
    %v617 = vunpack.c.l.s4 1966171168
    %v618 = vunpack.c.0.s8 %v617
    %v619 = vlaneseq
    %v620 = vshrl.u32 %v619, 7
    %v621 = vsub.s32 %v618, %v620
    %v622 = vrot.slane %v129, %v621
    %v624 = vunpack.c.l.s4 1966171168
    %v625 = vunpack.c.0.s8 %v624
    %v626 = vlaneseq
    %v627 = vshrl.u32 %v626, 7
    %v628 = vsub.s32 %v625, %v627
    %v629 = vrot.slane %v615, %v628
    %v630 = vcombine.high %v622, %v622
    %v631 = vcombine.high %v629, %v629
    %v633 = vunpack.c.l.s4 1966171168
    %v634 = vunpack.c.0.s8 %v633
    %v635 = vlaneseq
    %v636 = vshrl.u32 %v635, 7
    %v637 = vsub.s32 %v634, %v636
    %v638 = vrot.slane %v622, %v637
    %v640 = vunpack.c.l.s4 1966171168
    %v641 = vunpack.c.0.s8 %v640
    %v642 = vlaneseq
    %v643 = vshrl.u32 %v642, 7
    %v644 = vsub.s32 %v641, %v643
    %v645 = vrot.slane %v629, %v644
    %v647 = vunpack.c.l.s4 1966171168
    %v648 = vunpack.c.0.s8 %v647
    %v649 = vlaneseq
    %v650 = vshrl.u32 %v649, 7
    %v651 = vsub.s32 %v648, %v650
    %v652 = vrot.slane %v630, %v651
    %v654 = vunpack.c.l.s4 1966171168
    %v655 = vunpack.c.0.s8 %v654
    %v656 = vlaneseq
    %v657 = vshrl.u32 %v656, 7
    %v658 = vsub.s32 %v655, %v657
    %v659 = vrot.slane %v631, %v658
    %v660 = vcombine.high %v638, %v638
    %v661 = vcombine.high %v645, %v645
    %v662 = vcombine.high %v652, %v652
    %v663 = vcombine.high %v659, %v659
    %v664 = vcombine.high %v134, %v134
    %v666 = vunpack.c.l.s4 1966171168
    %v667 = vunpack.c.0.s8 %v666
    %v668 = vlaneseq
    %v669 = vshrl.u32 %v668, 7
    %v670 = vsub.s32 %v667, %v669
    %v671 = vrot.slane %v134, %v670
    %v673 = vunpack.c.l.s4 1966171168
    %v674 = vunpack.c.0.s8 %v673
    %v675 = vlaneseq
    %v676 = vshrl.u32 %v675, 7
    %v677 = vsub.s32 %v674, %v676
    %v678 = vrot.slane %v664, %v677
    %v679 = vcombine.high %v671, %v671
    %v680 = vcombine.high %v678, %v678
    %v682 = vunpack.c.l.s4 1966171168
    %v683 = vunpack.c.0.s8 %v682
    %v684 = vlaneseq
    %v685 = vshrl.u32 %v684, 7
    %v686 = vsub.s32 %v683, %v685
    %v687 = vrot.slane %v671, %v686
    %v689 = vunpack.c.l.s4 1966171168
    %v690 = vunpack.c.0.s8 %v689
    %v691 = vlaneseq
    %v692 = vshrl.u32 %v691, 7
    %v693 = vsub.s32 %v690, %v692
    %v694 = vrot.slane %v678, %v693
    %v696 = vunpack.c.l.s4 1966171168
    %v697 = vunpack.c.0.s8 %v696
    %v698 = vlaneseq
    %v699 = vshrl.u32 %v698, 7
    %v700 = vsub.s32 %v697, %v699
    %v701 = vrot.slane %v679, %v700
    %v703 = vunpack.c.l.s4 1966171168
    %v704 = vunpack.c.0.s8 %v703
    %v705 = vlaneseq
    %v706 = vshrl.u32 %v705, 7
    %v707 = vsub.s32 %v704, %v706
    %v708 = vrot.slane %v680, %v707
    %v709 = vcombine.high %v687, %v687
    %v710 = vcombine.high %v694, %v694
    %v711 = vcombine.high %v701, %v701
    %v712 = vcombine.high %v708, %v708
    %v713 = vlaneseq
    %v714 = vshrl.u32 %v713, 7
    %v715 = vsub.s32 0, %v714
    %v716 = vrot.slane %v638, %v715
    %v717 = vlaneseq
    %v718 = vshrl.u32 %v717, 7
    %v719 = vsub.s32 0, %v718
    %v720 = vrot.slane %v652, %v719
    %v721 = vlaneseq
    %v722 = vshrl.u32 %v721, 7
    %v723 = vsub.s32 0, %v722
    %v724 = vrot.slane %v660, %v723
    %v725 = vlaneseq
    %v726 = vshrl.u32 %v725, 7
    %v727 = vsub.s32 0, %v726
    %v728 = vrot.slane %v662, %v727
    %v729 = vlaneseq
    %v730 = vshrl.u32 %v729, 7
    %v731 = vsub.s32 0, %v730
    %v732 = vrot.slane %v645, %v731
    %v733 = vlaneseq
    %v734 = vshrl.u32 %v733, 7
    %v735 = vsub.s32 0, %v734
    %v736 = vrot.slane %v659, %v735
    %v737 = vlaneseq
    %v738 = vshrl.u32 %v737, 7
    %v739 = vsub.s32 0, %v738
    %v740 = vrot.slane %v661, %v739
    %v741 = vlaneseq
    %v742 = vshrl.u32 %v741, 7
    %v743 = vsub.s32 0, %v742
    %v744 = vrot.slane %v663, %v743
    %v745 = vlaneseq
    %v746 = vshrl.u32 %v745, 7
    %v747 = vsub.s32 0, %v746
    %v748 = vrot.slane %v687, %v747
    %v749 = vlaneseq
    %v750 = vshrl.u32 %v749, 7
    %v751 = vsub.s32 0, %v750
    %v752 = vrot.slane %v701, %v751
    %v753 = vlaneseq
    %v754 = vshrl.u32 %v753, 7
    %v755 = vsub.s32 0, %v754
    %v756 = vrot.slane %v709, %v755
    %v757 = vlaneseq
    %v758 = vshrl.u32 %v757, 7
    %v759 = vsub.s32 0, %v758
    %v760 = vrot.slane %v711, %v759
    %v761 = vlaneseq
    %v762 = vshrl.u32 %v761, 7
    %v763 = vsub.s32 0, %v762
    %v764 = vrot.slane %v694, %v763
    %v765 = vlaneseq
    %v766 = vshrl.u32 %v765, 7
    %v767 = vsub.s32 0, %v766
    %v768 = vrot.slane %v708, %v767
    %v769 = vlaneseq
    %v770 = vshrl.u32 %v769, 7
    %v771 = vsub.s32 0, %v770
    %v772 = vrot.slane %v710, %v771
    %v773 = vlaneseq
    %v774 = vshrl.u32 %v773, 7
    %v775 = vsub.s32 0, %v774
    %v776 = vrot.slane %v712, %v775
    %v793 = vadd.f32 %v535, %v716
    %v794 = vadd.f32 %v540, %v720
    %v795 = vadd.f32 %v545, %v724
    %v796 = vadd.f32 %v550, %v728
    %v797 = vadd.f32 %v555, %v732
    %v798 = vadd.f32 %v560, %v736
    %v799 = vadd.f32 %v565, %v740
    %v800 = vadd.f32 %v570, %v744
    %v801 = vadd.f32 %v575, %v748
    %v802 = vadd.f32 %v580, %v752
    %v803 = vadd.f32 %v585, %v756
    %v804 = vadd.f32 %v590, %v760
    %v805 = vadd.f32 %v595, %v764
    %v806 = vadd.f32 %v600, %v768
    %v807 = vadd.f32 %v605, %v772
    %v808 = vadd.f32 %v610, %v776
    %v809 = vmul.f32 %v793, 0.01
    %v810 = vmul.f32 %v794, 0.01
    %v811 = vmul.f32 %v795, 0.01
    %v812 = vmul.f32 %v796, 0.01
    %v813 = vmul.f32 %v797, 0.01
    %v814 = vmul.f32 %v798, 0.01
    %v815 = vmul.f32 %v799, 0.01
    %v816 = vmul.f32 %v800, 0.01
    %v817 = vmul.f32 %v801, 0.01
    %v818 = vmul.f32 %v802, 0.01
    %v819 = vmul.f32 %v803, 0.01
    %v820 = vmul.f32 %v804, 0.01
    %v821 = vmul.f32 %v805, 0.01
    %v822 = vmul.f32 %v806, 0.01
    %v823 = vmul.f32 %v807, 0.01
    %v824 = vmul.f32 %v808, 0.01
    %v825 = vmax.f32 %v793, %v809
    %v826 = vmax.f32 %v794, %v810
    %v827 = vmax.f32 %v795, %v811
    %v828 = vmax.f32 %v796, %v812
    %v829 = vmax.f32 %v797, %v813
    %v830 = vmax.f32 %v798, %v814
    %v831 = vmax.f32 %v799, %v815
    %v832 = vmax.f32 %v800, %v816
    %v833 = vmax.f32 %v801, %v817
    %v834 = vmax.f32 %v802, %v818
    %v835 = vmax.f32 %v803, %v819
    %v836 = vmax.f32 %v804, %v820
    %v837 = vmax.f32 %v805, %v821
    %v838 = vmax.f32 %v806, %v822
    %v839 = vmax.f32 %v807, %v823
    %v840 = vmax.f32 %v808, %v824
    %v841 = vlaneseq
    %v842 = vshrl.u32 %v841, 7
    %v843 = vsub.s32 1, %v842
    %v844 = vrot.slane %v39, %v843
    %v845 = vmul.f32 %v825, %v844
    %v846 = vmul.f32 %v826, %v844
    %v847 = vmul.f32 %v827, %v844
    %v848 = vmul.f32 %v828, %v844
    %v849 = vmul.f32 %v829, %v844
    %v850 = vmul.f32 %v830, %v844
    %v851 = vmul.f32 %v831, %v844
    %v852 = vmul.f32 %v832, %v844
    %v853 = vmul.f32 %v833, %v844
    %v854 = vmul.f32 %v834, %v844
    %v855 = vmul.f32 %v835, %v844
    %v856 = vmul.f32 %v836, %v844
    %v857 = vmul.f32 %v837, %v844
    %v858 = vmul.f32 %v838, %v844
    %v859 = vmul.f32 %v839, %v844
    %v860 = vmul.f32 %v840, %v844
    %vm861 = vcmask 326656
    %v862 = vsel %vm861, %v845, 0.0
    %863 = vadd.xlane.f32.xlu0 %v862
    %v864 = vpop.xlane.xlu0 %863
    %v865 = vsel %vm861, %v846, 0.0
    %866 = vadd.xlane.f32.xlu0 %v865
    %v867 = vpop.xlane.xlu0 %866
    %v868 = vsel %vm861, %v847, 0.0
    %869 = vadd.xlane.f32.xlu0 %v868
    %v870 = vpop.xlane.xlu0 %869
    %v871 = vsel %vm861, %v848, 0.0
    %872 = vadd.xlane.f32.xlu0 %v871
    %v873 = vpop.xlane.xlu0 %872
    %v874 = vsel %vm861, %v849, 0.0
    %875 = vadd.xlane.f32.xlu0 %v874
    %v876 = vpop.xlane.xlu0 %875
    %v877 = vsel %vm861, %v850, 0.0
    %878 = vadd.xlane.f32.xlu0 %v877
    %v879 = vpop.xlane.xlu0 %878
    %v880 = vsel %vm861, %v851, 0.0
    %881 = vadd.xlane.f32.xlu0 %v880
    %v882 = vpop.xlane.xlu0 %881
    %v883 = vsel %vm861, %v852, 0.0
    %884 = vadd.xlane.f32.xlu0 %v883
    %v885 = vpop.xlane.xlu0 %884
    %v886 = vsel %vm861, %v853, 0.0
    %887 = vadd.xlane.f32.xlu0 %v886
    %v888 = vpop.xlane.xlu0 %887
    %v889 = vsel %vm861, %v854, 0.0
    %890 = vadd.xlane.f32.xlu0 %v889
    %v891 = vpop.xlane.xlu0 %890
    %v892 = vsel %vm861, %v855, 0.0
    %893 = vadd.xlane.f32.xlu0 %v892
    %v894 = vpop.xlane.xlu0 %893
    %v895 = vsel %vm861, %v856, 0.0
    %896 = vadd.xlane.f32.xlu0 %v895
    %v897 = vpop.xlane.xlu0 %896
    %v898 = vsel %vm861, %v857, 0.0
    %899 = vadd.xlane.f32.xlu0 %v898
    %v900 = vpop.xlane.xlu0 %899
    %v901 = vsel %vm861, %v858, 0.0
    %902 = vadd.xlane.f32.xlu0 %v901
    %v903 = vpop.xlane.xlu0 %902
    %v904 = vsel %vm861, %v859, 0.0
    %905 = vadd.xlane.f32.xlu0 %v904
    %v906 = vpop.xlane.xlu0 %905
    %v907 = vsel %vm861, %v860, 0.0
    %908 = vadd.xlane.f32.xlu0 %v907
    %v909 = vpop.xlane.xlu0 %908
    %v910 = vlaneseq
    %v911 = vshrl.u32 %v910, 7
    %v912 = vsub.s32 2, %v911
    %v913 = vrot.slane %v39, %v912
    %v914 = vadd.f32 %v864, %v913
    %v915 = vadd.f32 %v867, %v913
    %v916 = vadd.f32 %v870, %v913
    %v917 = vadd.f32 %v873, %v913
    %v918 = vadd.f32 %v876, %v913
    %v919 = vadd.f32 %v879, %v913
    %v920 = vadd.f32 %v882, %v913
    %v921 = vadd.f32 %v885, %v913
    %v922 = vadd.f32 %v888, %v913
    %v923 = vadd.f32 %v891, %v913
    %v924 = vadd.f32 %v894, %v913
    %v925 = vadd.f32 %v897, %v913
    %v926 = vadd.f32 %v900, %v913
    %v927 = vadd.f32 %v903, %v913
    %v928 = vadd.f32 %v906, %v913
    %v929 = vadd.f32 %v909, %v913
    %v930 = vtanh.pop %v914
    %v931 = vtanh.pop %v915
    %v932 = vtanh.pop %v916
    %v933 = vtanh.pop %v917
    %v934 = vtanh.pop %v918
    %v935 = vtanh.pop %v919
    %v936 = vtanh.pop %v920
    %v937 = vtanh.pop %v921
    %v938 = vtanh.pop %v922
    %v939 = vtanh.pop %v923
    %v940 = vtanh.pop %v924
    %v941 = vtanh.pop %v925
    %v942 = vtanh.pop %v926
    %v943 = vtanh.pop %v927
    %v944 = vtanh.pop %v928
    %v945 = vtanh.pop %v929
    %v946 = vadd.f32 %v930, 1.0
    %v947 = vadd.f32 %v931, 1.0
    %v948 = vadd.f32 %v932, 1.0
    %v949 = vadd.f32 %v933, 1.0
    %v950 = vadd.f32 %v934, 1.0
    %v951 = vadd.f32 %v935, 1.0
    %v952 = vadd.f32 %v936, 1.0
    %v953 = vadd.f32 %v937, 1.0
    %v954 = vadd.f32 %v938, 1.0
    %v955 = vadd.f32 %v939, 1.0
    %v956 = vadd.f32 %v940, 1.0
    %v957 = vadd.f32 %v941, 1.0
    %v958 = vadd.f32 %v942, 1.0
    %v959 = vadd.f32 %v943, 1.0
    %v960 = vadd.f32 %v944, 1.0
    %v961 = vadd.f32 %v945, 1.0
    %v962 = vmul.f32 %v946, 0.15811388
    %v963 = vmul.f32 %v947, 0.15811388
    %v964 = vmul.f32 %v948, 0.15811388
    %v965 = vmul.f32 %v949, 0.15811388
    %v966 = vmul.f32 %v950, 0.15811388
    %v967 = vmul.f32 %v951, 0.15811388
    %v968 = vmul.f32 %v952, 0.15811388
    %v969 = vmul.f32 %v953, 0.15811388
    %v970 = vmul.f32 %v954, 0.15811388
    %v971 = vmul.f32 %v955, 0.15811388
    %v972 = vmul.f32 %v956, 0.15811388
    %v973 = vmul.f32 %v957, 0.15811388
    %v974 = vmul.f32 %v958, 0.15811388
    %v975 = vmul.f32 %v959, 0.15811388
    %v976 = vmul.f32 %v960, 0.15811388
    %v977 = vmul.f32 %v961, 0.15811388
    %979 = vset.pattern.permute.xlu0 0
    %980 = vperm.xlu0 %979, %v962
    %v981 = vpop.permute.xlu0 %980
    %984 = vset.pattern.permute.xlu0 0
    %985 = vperm.xlu0 %984, %v963
    %v986 = vpop.permute.xlu0 %985
    %989 = vset.pattern.permute.xlu0 0
    %990 = vperm.xlu0 %989, %v964
    %v991 = vpop.permute.xlu0 %990
    %994 = vset.pattern.permute.xlu0 0
    %995 = vperm.xlu0 %994, %v965
    %v996 = vpop.permute.xlu0 %995
    %999 = vset.pattern.permute.xlu0 0
    %1000 = vperm.xlu0 %999, %v966
    %v1001 = vpop.permute.xlu0 %1000
    %1004 = vset.pattern.permute.xlu0 0
    %1005 = vperm.xlu0 %1004, %v967
    %v1006 = vpop.permute.xlu0 %1005
    %1009 = vset.pattern.permute.xlu0 0
    %1010 = vperm.xlu0 %1009, %v968
    %v1011 = vpop.permute.xlu0 %1010
    %1014 = vset.pattern.permute.xlu0 0
    %1015 = vperm.xlu0 %1014, %v969
    %v1016 = vpop.permute.xlu0 %1015
    %1019 = vset.pattern.permute.xlu0 0
    %1020 = vperm.xlu0 %1019, %v970
    %v1021 = vpop.permute.xlu0 %1020
    %1024 = vset.pattern.permute.xlu0 0
    %1025 = vperm.xlu0 %1024, %v971
    %v1026 = vpop.permute.xlu0 %1025
    %1029 = vset.pattern.permute.xlu0 0
    %1030 = vperm.xlu0 %1029, %v972
    %v1031 = vpop.permute.xlu0 %1030
    %1034 = vset.pattern.permute.xlu0 0
    %1035 = vperm.xlu0 %1034, %v973
    %v1036 = vpop.permute.xlu0 %1035
    %1039 = vset.pattern.permute.xlu0 0
    %1040 = vperm.xlu0 %1039, %v974
    %v1041 = vpop.permute.xlu0 %1040
    %1044 = vset.pattern.permute.xlu0 0
    %1045 = vperm.xlu0 %1044, %v975
    %v1046 = vpop.permute.xlu0 %1045
    %1049 = vset.pattern.permute.xlu0 0
    %1050 = vperm.xlu0 %1049, %v976
    %v1051 = vpop.permute.xlu0 %1050
    %1054 = vset.pattern.permute.xlu0 0
    %1055 = vperm.xlu0 %1054, %v977
    %v1056 = vpop.permute.xlu0 %1055
    %v1058 = vmul.f32 %v981, %v23
    %v1059 = vmul.f32 %v986, %v24
    %v1060 = vmul.f32 %v991, %v25
    %v1061 = vmul.f32 %v996, %v26
    %v1062 = vmul.f32 %v1001, %v27
    %v1063 = vmul.f32 %v1006, %v28
    %v1064 = vmul.f32 %v1011, %v29
    %v1065 = vmul.f32 %v1016, %v30
    %v1066 = vmul.f32 %v1021, %v31
    %v1067 = vmul.f32 %v1026, %v32
    %v1068 = vmul.f32 %v1031, %v33
    %v1069 = vmul.f32 %v1036, %v34
    %v1070 = vmul.f32 %v1041, %v35
    %v1071 = vmul.f32 %v1046, %v36
    %v1072 = vmul.f32 %v1051, %v37
    %v1073 = vmul.f32 %v1056, %v38
    %v1074 = vsel %vm395, %v1058, 0.0
    %v1075 = vrot.slane %v1074, 4
    %v1076 = vadd.f32 %v1074, %v1075
    %v1077 = vrot.slane %v1076, 2
    %v1078 = vadd.f32 %v1076, %v1077
    %v1079 = vrot.slane %v1078, 1
    %v1080 = vadd.f32 %v1078, %v1079
    %v1081 = vsel %vm395, %v1059, 0.0
    %v1082 = vrot.slane %v1081, 4
    %v1083 = vadd.f32 %v1081, %v1082
    %v1084 = vrot.slane %v1083, 2
    %v1085 = vadd.f32 %v1083, %v1084
    %v1086 = vrot.slane %v1085, 1
    %v1087 = vadd.f32 %v1085, %v1086
    %v1088 = vsel %vm395, %v1060, 0.0
    %v1089 = vrot.slane %v1088, 4
    %v1090 = vadd.f32 %v1088, %v1089
    %v1091 = vrot.slane %v1090, 2
    %v1092 = vadd.f32 %v1090, %v1091
    %v1093 = vrot.slane %v1092, 1
    %v1094 = vadd.f32 %v1092, %v1093
    %v1095 = vsel %vm395, %v1061, 0.0
    %v1096 = vrot.slane %v1095, 4
    %v1097 = vadd.f32 %v1095, %v1096
    %v1098 = vrot.slane %v1097, 2
    %v1099 = vadd.f32 %v1097, %v1098
    %v1100 = vrot.slane %v1099, 1
    %v1101 = vadd.f32 %v1099, %v1100
    %v1102 = vsel %vm395, %v1062, 0.0
    %v1103 = vrot.slane %v1102, 4
    %v1104 = vadd.f32 %v1102, %v1103
    %v1105 = vrot.slane %v1104, 2
    %v1106 = vadd.f32 %v1104, %v1105
    %v1107 = vrot.slane %v1106, 1
    %v1108 = vadd.f32 %v1106, %v1107
    %v1109 = vsel %vm395, %v1063, 0.0
    %v1110 = vrot.slane %v1109, 4
    %v1111 = vadd.f32 %v1109, %v1110
    %v1112 = vrot.slane %v1111, 2
    %v1113 = vadd.f32 %v1111, %v1112
    %v1114 = vrot.slane %v1113, 1
    %v1115 = vadd.f32 %v1113, %v1114
    %v1116 = vsel %vm395, %v1064, 0.0
    %v1117 = vrot.slane %v1116, 4
    %v1118 = vadd.f32 %v1116, %v1117
    %v1119 = vrot.slane %v1118, 2
    %v1120 = vadd.f32 %v1118, %v1119
    %v1121 = vrot.slane %v1120, 1
    %v1122 = vadd.f32 %v1120, %v1121
    %v1123 = vsel %vm395, %v1065, 0.0
    %v1124 = vrot.slane %v1123, 4
    %v1125 = vadd.f32 %v1123, %v1124
    %v1126 = vrot.slane %v1125, 2
    %v1127 = vadd.f32 %v1125, %v1126
    %v1128 = vrot.slane %v1127, 1
    %v1129 = vadd.f32 %v1127, %v1128
    %v1130 = vsel %vm395, %v1066, 0.0
    %v1131 = vrot.slane %v1130, 4
    %v1132 = vadd.f32 %v1130, %v1131
    %v1133 = vrot.slane %v1132, 2
    %v1134 = vadd.f32 %v1132, %v1133
    %v1135 = vrot.slane %v1134, 1
    %v1136 = vadd.f32 %v1134, %v1135
    %v1137 = vsel %vm395, %v1067, 0.0
    %v1138 = vrot.slane %v1137, 4
    %v1139 = vadd.f32 %v1137, %v1138
    %v1140 = vrot.slane %v1139, 2
    %v1141 = vadd.f32 %v1139, %v1140
    %v1142 = vrot.slane %v1141, 1
    %v1143 = vadd.f32 %v1141, %v1142
    %v1144 = vsel %vm395, %v1068, 0.0
    %v1145 = vrot.slane %v1144, 4
    %v1146 = vadd.f32 %v1144, %v1145
    %v1147 = vrot.slane %v1146, 2
    %v1148 = vadd.f32 %v1146, %v1147
    %v1149 = vrot.slane %v1148, 1
    %v1150 = vadd.f32 %v1148, %v1149
    %v1151 = vsel %vm395, %v1069, 0.0
    %v1152 = vrot.slane %v1151, 4
    %v1153 = vadd.f32 %v1151, %v1152
    %v1154 = vrot.slane %v1153, 2
    %v1155 = vadd.f32 %v1153, %v1154
    %v1156 = vrot.slane %v1155, 1
    %v1157 = vadd.f32 %v1155, %v1156
    %v1158 = vsel %vm395, %v1070, 0.0
    %v1159 = vrot.slane %v1158, 4
    %v1160 = vadd.f32 %v1158, %v1159
    %v1161 = vrot.slane %v1160, 2
    %v1162 = vadd.f32 %v1160, %v1161
    %v1163 = vrot.slane %v1162, 1
    %v1164 = vadd.f32 %v1162, %v1163
    %v1165 = vsel %vm395, %v1071, 0.0
    %v1166 = vrot.slane %v1165, 4
    %v1167 = vadd.f32 %v1165, %v1166
    %v1168 = vrot.slane %v1167, 2
    %v1169 = vadd.f32 %v1167, %v1168
    %v1170 = vrot.slane %v1169, 1
    %v1171 = vadd.f32 %v1169, %v1170
    %v1172 = vsel %vm395, %v1072, 0.0
    %v1173 = vrot.slane %v1172, 4
    %v1174 = vadd.f32 %v1172, %v1173
    %v1175 = vrot.slane %v1174, 2
    %v1176 = vadd.f32 %v1174, %v1175
    %v1177 = vrot.slane %v1176, 1
    %v1178 = vadd.f32 %v1176, %v1177
    %v1179 = vsel %vm395, %v1073, 0.0
    %v1180 = vrot.slane %v1179, 4
    %v1181 = vadd.f32 %v1179, %v1180
    %v1182 = vrot.slane %v1181, 2
    %v1183 = vadd.f32 %v1181, %v1182
    %v1184 = vrot.slane %v1183, 1
    %v1185 = vadd.f32 %v1183, %v1184
    %vm1202 = vcmask 1041409
    %v1203 = vsel %vm1202, %v1087, %v1080
    %vm1204 = vcmask 1042434
    %v1205 = vsel %vm1204, %v1094, %v1203
    %vm1206 = vcmask 1043459
    %v1207 = vsel %vm1206, %v1101, %v1205
    %vm1208 = vcmask 1044484
    %v1209 = vsel %vm1208, %v1108, %v1207
    %vm1210 = vcmask 1045509
    %v1211 = vsel %vm1210, %v1115, %v1209
    %vm1212 = vcmask 1046534
    %v1213 = vsel %vm1212, %v1122, %v1211
    %vm1214 = vcmask 1047559
    %v1215 = vsel %vm1214, %v1129, %v1213
    %v1216 = vsel %vm1202, %v1143, %v1136
    %v1217 = vsel %vm1204, %v1150, %v1216
    %v1218 = vsel %vm1206, %v1157, %v1217
    %v1219 = vsel %vm1208, %v1164, %v1218
    %v1220 = vsel %vm1210, %v1171, %v1219
    %v1221 = vsel %vm1212, %v1178, %v1220
    %v1222 = vsel %vm1214, %v1185, %v1221
    %1225 = vst.msk [vmem:[#allocation2] sm:$0xff] %vm395, %v1215
    %1226 = vst.msk [vmem:[#allocation2 + $0x8] sm:$0xff] %vm395, %v1222
    // Predicated region
    $region22: #{attention_layer_forward.1} parent=1 // pred_check
      _
    $region23: #{attention_layer_forward.1} parent=1 // pred_check_branch
      %1228 = sbr.rel (0) target = $region25
    $region24: #{attention_layer_forward.1} parent=1 // pred_region
      %s1230 = ssub.s32 256, 256
      %1231 = vsyncadd [#allocation3], %s1230
      %s1232 = sshll.u32 [#allocation2], 4
      %s1233 = int_to_ptr.vmem [resolvable:$true] %s1232
      %1238 = dma.vmem_to_hbm [thread:$0]  %s1233, 256, %s5, [#allocation3], 128, 128, 8
    $region25: #{attention_layer_forward.1} parent=1 // pred_fallthru
      _
    // Predicated region
    $region26: #{attention_layer_forward.1} parent=1 // pred_check
      _
    $region27: #{attention_layer_forward.1} parent=1 // pred_check_branch
      %1240 = sbr.rel (0) target = $region29
    $region28: #{attention_layer_forward.1} parent=1 // pred_region
      %1241 = dma.done [#allocation3], 256
    $region29: #{attention_layer_forward.1} parent=1 // pred_fallthru
      _
    %1242 = vsyncpa [#allocation3], 1

</llo_original>
